<compile_context>
chip_gen: v7x
topology: tpu7x:2x2x1
jax: 0.10.0
libtpu: 0.0.40
codegen_flags: <defaults>
</compile_context>

<pallas_src>
import jax
import jax.numpy as jnp
from jax.experimental import pallas as pl
from jax.experimental.pallas import tpu as pltpu

input_size = 2
hidden_size = 2
output_size = 1


def mlp_kernel(w1_ref, b1_ref, w2_ref, b2_ref, x_ref, out_ref):
    # x_ref: (input_size, TB) VMEM block, batch on the lane axis.
    # w1_ref: (input_size*hidden_size,) f32 in SMEM (row-major over (in, hid)).
    # b1_ref: (hidden_size,), w2_ref: (hidden_size*output_size,), b2_ref: (output_size,)
    xs = [x_ref[i:i + 1, :].astype(jnp.float32) for i in range(input_size)]

    # fc1 + sigmoid: h_j = sum_i x_i * w1[i, j] + b1[j]   (pure VPU FMAs, no MXU)
    hs = []
    for j in range(hidden_size):
        acc = b1_ref[j]
        for i in range(input_size):
            acc = acc + xs[i] * w1_ref[i * hidden_size + j]
        hs.append(jax.nn.sigmoid(acc))  # EUP transcendental, (1, TB)

    # fc2 + sigmoid: o_k = sum_j h_j * w2[j, k] + b2[k]
    for k in range(output_size):
        acc = b2_ref[k]
        for j in range(hidden_size):
            acc = acc + hs[j] * w2_ref[j * output_size + k]
        out_ref[k:k + 1, :] = jax.nn.sigmoid(acc).astype(out_ref.dtype)


def _round_up(n, m):
    return ((n + m - 1) // m) * m


def mlp_forward(x, w1, b1, w2, b2, *, batch_tile=512):
    """x: (B, input_size); w1: (input_size, hidden_size); b1: (hidden_size,);
    w2: (hidden_size, output_size); b2: (output_size,). Returns (B, output_size)."""
    B = x.shape[0]
    # Lane-dense batch tile: at least 128 (one vreg of lanes), at most batch_tile.
    TB = min(batch_tile, _round_up(B, 128))
    B_pad = _round_up(B, TB)

    # Feature-major activations: batch on the lane axis, padded to the tile.
    xT = jnp.pad(x.T, ((0, 0), (0, B_pad - B)))

    out_t = pl.pallas_call(
        mlp_kernel,
        out_shape=jax.ShapeDtypeStruct((output_size, B_pad), x.dtype),
        grid_spec=pltpu.PrefetchScalarGridSpec(
            num_scalar_prefetch=0,
            grid=(B_pad // TB,),
            in_specs=[
                # 9 scalars total -> SMEM, not (8,128)-padded VMEM tiles.
                pl.BlockSpec(memory_space=pltpu.MemorySpace.SMEM),  # w1 flat
                pl.BlockSpec(memory_space=pltpu.MemorySpace.SMEM),  # b1
                pl.BlockSpec(memory_space=pltpu.MemorySpace.SMEM),  # w2 flat
                pl.BlockSpec(memory_space=pltpu.MemorySpace.SMEM),  # b2
                # Activations: (input_size, TB) block, batch tiled over grid.
                pl.BlockSpec((input_size, TB), lambda i: (0, i)),
            ],
            out_specs=pl.BlockSpec((output_size, TB), lambda i: (0, i)),
        ),
        compiler_params=pltpu.CompilerParams(
            # Batch axis is independent -> "parallel" (shards across v7x's 2 TCs).
            dimension_semantics=("parallel",),
            vmem_limit_bytes=32 * 1024 * 1024,  # tiny tiles; safe on v7x's 64 MiB VMEM
        ),
    )(w1.reshape(-1), b1.reshape(-1), w2.reshape(-1), b2.reshape(-1), xT)

    # Back to the PyTorch-facing (B, output_size) layout; drop the batch padding.
    return out_t.T[:B]


def init_params(key):
    """Deterministic init mimicking PyTorch nn.Linear defaults:
    U(-1/sqrt(fan_in), 1/sqrt(fan_in)) for weights and biases."""
    k1, k2, k3, k4 = jax.random.split(key, 4)
    bound1 = 1.0 / jnp.sqrt(float(input_size))
    bound2 = 1.0 / jnp.sqrt(float(hidden_size))
    # stored as (in_features, out_features) = W.T relative to PyTorch
    w1 = jax.random.uniform(k1, (input_size, hidden_size), jnp.float32, -bound1, bound1)
    b1 = jax.random.uniform(k2, (hidden_size,), jnp.float32, -bound1, bound1)
    w2 = jax.random.uniform(k3, (hidden_size, output_size), jnp.float32, -bound2, bound2)
    b2 = jax.random.uniform(k4, (output_size,), jnp.float32, -bound2, bound2)
    return w1, b1, w2, b2


def mlp_reference(x, w1, b1, w2, b2):
    h = jax.nn.sigmoid(x @ w1 + b1)
    return jax.nn.sigmoid(h @ w2 + b2)


if __name__ == "__main__":
    key = jax.random.PRNGKey(0)
    kx, kp = jax.random.split(key)

    batch = 8
    x = jax.random.normal(kx, (batch, input_size), jnp.float32)
    w1, b1, w2, b2 = init_params(kp)

    out = mlp_forward(x, w1, b1, w2, b2)
    out = jax.block_until_ready(out)

    ref = mlp_reference(x, w1, b1, w2, b2)
    assert out.shape == (batch, output_size), out.shape
    assert jnp.allclose(out, ref, atol=1e-5, rtol=1e-5), (out, ref)

    print("KERNEL_OK")
</pallas_src>

<mosaic_0001>
module attributes {stable_mosaic.version = 11 : i64} {
  func.func @mlp_kernel(%arg0: i32, %arg1: memref<4xf32, #tpu.memory_space<smem>>, %arg2: memref<2xf32, #tpu.memory_space<smem>>, %arg3: memref<2xf32, #tpu.memory_space<smem>>, %arg4: memref<1xf32, #tpu.memory_space<smem>>, %arg5: memref<2x128xf32, #tpu.memory_space<vmem>>, %arg6: memref<1x128xf32, #tpu.memory_space<vmem>>) attributes {dimension_semantics = [#tpu.dimension_semantics<parallel>], iteration_bounds = array<i64: 1>, scalar_prefetch = 0 : i64, scratch_operands = 0 : i64, tpu.core_type = #tpu.core_type<tc>, window_params = [{transform_indices = @transform_0, window_bounds = array<i64: 4>}, {transform_indices = @transform_1, window_bounds = array<i64: 2>}, {transform_indices = @transform_2, window_bounds = array<i64: 2>}, {transform_indices = @transform_3, window_bounds = array<i64: 1>}, {transform_indices = @transform_4, window_bounds = array<i64: 2, 128>}, {transform_indices = @transform_5, window_bounds = array<i64: 1, 128>}]} {
    %c0 = arith.constant 0 : index
    %c0_0 = arith.constant 0 : index
    %0 = vector.load %arg5[%c0, %c0_0] : memref<2x128xf32, #tpu.memory_space<vmem>>, vector<1x128xf32>
    %c1 = arith.constant 1 : index
    %c0_1 = arith.constant 0 : index
    %1 = vector.load %arg5[%c1, %c0_1] : memref<2x128xf32, #tpu.memory_space<vmem>>, vector<1x128xf32>
    %c0_2 = arith.constant 0 : index
    %2 = memref.load %arg2[%c0_2] : memref<2xf32, #tpu.memory_space<smem>>
    %c0_3 = arith.constant 0 : index
    %3 = memref.load %arg1[%c0_3] : memref<4xf32, #tpu.memory_space<smem>>
    %4 = vector.broadcast %3 : f32 to vector<1x128xf32>
    %5 = arith.mulf %0, %4 : vector<1x128xf32>
    %6 = vector.broadcast %2 : f32 to vector<1x128xf32>
    %7 = arith.addf %6, %5 : vector<1x128xf32>
    %c2 = arith.constant 2 : index
    %8 = memref.load %arg1[%c2] : memref<4xf32, #tpu.memory_space<smem>>
    %9 = vector.broadcast %8 : f32 to vector<1x128xf32>
    %10 = arith.mulf %1, %9 : vector<1x128xf32>
    %11 = arith.addf %7, %10 : vector<1x128xf32>
    %12 = arith.negf %11 : vector<1x128xf32>
    %13 = math.exp %12 : vector<1x128xf32>
    %cst = arith.constant 1.000000e+00 : f32
    %14 = vector.broadcast %cst : f32 to vector<1x128xf32>
    %15 = arith.addf %14, %13 : vector<1x128xf32>
    %16 = arith.divf %14, %15 : vector<1x128xf32>
    %c1_4 = arith.constant 1 : index
    %17 = memref.load %arg2[%c1_4] : memref<2xf32, #tpu.memory_space<smem>>
    %c1_5 = arith.constant 1 : index
    %18 = memref.load %arg1[%c1_5] : memref<4xf32, #tpu.memory_space<smem>>
    %19 = vector.broadcast %18 : f32 to vector<1x128xf32>
    %20 = arith.mulf %0, %19 : vector<1x128xf32>
    %21 = vector.broadcast %17 : f32 to vector<1x128xf32>
    %22 = arith.addf %21, %20 : vector<1x128xf32>
    %c3 = arith.constant 3 : index
    %23 = memref.load %arg1[%c3] : memref<4xf32, #tpu.memory_space<smem>>
    %24 = vector.broadcast %23 : f32 to vector<1x128xf32>
    %25 = arith.mulf %1, %24 : vector<1x128xf32>
    %26 = arith.addf %22, %25 : vector<1x128xf32>
    %27 = arith.negf %26 : vector<1x128xf32>
    %28 = math.exp %27 : vector<1x128xf32>
    %cst_6 = arith.constant 1.000000e+00 : f32
    %29 = vector.broadcast %cst_6 : f32 to vector<1x128xf32>
    %30 = arith.addf %29, %28 : vector<1x128xf32>
    %31 = arith.divf %29, %30 : vector<1x128xf32>
    %c0_7 = arith.constant 0 : index
    %32 = memref.load %arg4[%c0_7] : memref<1xf32, #tpu.memory_space<smem>>
    %c0_8 = arith.constant 0 : index
    %33 = memref.load %arg3[%c0_8] : memref<2xf32, #tpu.memory_space<smem>>
    %34 = vector.broadcast %33 : f32 to vector<1x128xf32>
    %35 = arith.mulf %16, %34 : vector<1x128xf32>
    %36 = vector.broadcast %32 : f32 to vector<1x128xf32>
    %37 = arith.addf %36, %35 : vector<1x128xf32>
    %c1_9 = arith.constant 1 : index
    %38 = memref.load %arg3[%c1_9] : memref<2xf32, #tpu.memory_space<smem>>
    %39 = vector.broadcast %38 : f32 to vector<1x128xf32>
    %40 = arith.mulf %31, %39 : vector<1x128xf32>
    %41 = arith.addf %37, %40 : vector<1x128xf32>
    %42 = arith.negf %41 : vector<1x128xf32>
    %43 = math.exp %42 : vector<1x128xf32>
    %cst_10 = arith.constant 1.000000e+00 : f32
    %44 = vector.broadcast %cst_10 : f32 to vector<1x128xf32>
    %45 = arith.addf %44, %43 : vector<1x128xf32>
    %46 = arith.divf %44, %45 : vector<1x128xf32>
    %c0_11 = arith.constant 0 : index
    %c0_12 = arith.constant 0 : index
    %47 = vector.load %arg6[%c0_11, %c0_12] : memref<1x128xf32, #tpu.memory_space<vmem>>, vector<1x128xf32>
    tpu.vector_store %arg6[%c0_11, %c0_12], %46 {strides = array<i32>} : memref<1x128xf32, #tpu.memory_space<vmem>>, vector<1x128xf32>,
    return
  }
  func.func @transform_0(%arg0: i32) -> i32 {
    %c0_i32 = arith.constant 0 : i32
    %c0_i32_0 = arith.constant 0 : i32
    return %c0_i32 : i32
  }
  func.func @transform_1(%arg0: i32) -> i32 {
    %c0_i32 = arith.constant 0 : i32
    %c0_i32_0 = arith.constant 0 : i32
    return %c0_i32 : i32
  }
  func.func @transform_2(%arg0: i32) -> i32 {
    %c0_i32 = arith.constant 0 : i32
    %c0_i32_0 = arith.constant 0 : i32
    return %c0_i32 : i32
  }
  func.func @transform_3(%arg0: i32) -> i32 {
    %c0_i32 = arith.constant 0 : i32
    %c0_i32_0 = arith.constant 0 : i32
    return %c0_i32 : i32
  }
  func.func @transform_4(%arg0: i32) -> (i32, i32) {
    %c0_i32 = arith.constant 0 : i32
    %c0_i32_0 = arith.constant 0 : i32
    return %c0_i32, %arg0 : i32, i32
  }
  func.func @transform_5(%arg0: i32) -> (i32, i32) {
    %c0_i32 = arith.constant 0 : i32
    %c0_i32_0 = arith.constant 0 : i32
    return %c0_i32, %arg0 : i32, i32
  }
}

</mosaic_0001>

<llo_original>
// kernel: tpu_custom_call.1
$region0: #{tpu_custom_call.1}
  #allocation0 [shape = 'u32[]', space=smem, size = 0x4, offset = 0x4, fixed_abs, tag = 'smem constant byte address 0x4 - core index']
  #allocation1 [shape = 'u32[144,128]{1,0:T(1,128)}', space=vmem, size = 0x12000, scoped, tag = 'internal scratch']
  #allocation2 [shape = 'f32[1]{0:T(128)S(6)}', space=smem, size = 0x200, scoped, tag = 'scoped memory for tpu_custom_call.1']
  %s0 = inlined_call_operand.vmem [shape: f32[4], index: 0, kind: input, shape index: {}]
  %s1 = inlined_call_operand.vmem [shape: f32[2], index: 1, kind: input, shape index: {}]
  %s2 = inlined_call_operand.vmem [shape: f32[2], index: 2, kind: input, shape index: {}]
  %s3 = inlined_call_operand.<no memory space> [shape: f32[1], index: 3, kind: input, shape index: {}]
  %s4 = inlined_call_operand.vmem [shape: f32[2,128], index: 4, kind: input, shape index: {}]
  %s5 = inlined_call_operand.hbm [shape: f32[1,128], index: 5, kind: output, shape index: {}]
  %s6 = sld [smem:[#allocation0]]
  $region42: #{tpu_custom_call.1} parent=0
    _
  %s8 = ssub.s32 1, %s6
  %s9 = scalar_select 0, %s8, %s6
  %10 = sst [smem:[#allocation2]] %s3
  $region1: #{tpu_custom_call.1} parent=0
    #allocation3 [shape = 'u8[512]{0}', space=smem, size = 0x200, scoped, tag = 'input window, operand 0, single buffered']
    #allocation4 [shape = 's32[1]{0}', space=sflag, size = 0x4, scoped, tag = 'scoped memory for tpu_custom_call.1']
    #allocation5 [shape = 's32[1]{0}', space=sflag, size = 0x4, scoped, tag = 'scoped memory for tpu_custom_call.1']
    #allocation6 [shape = 'u8[512]{0}', space=smem, size = 0x200, scoped, tag = 'input window, operand 1, single buffered']
    #allocation7 [shape = 's32[1]{0}', space=sflag, size = 0x4, scoped, tag = 'scoped memory for tpu_custom_call.1']
    #allocation8 [shape = 'u8[512]{0}', space=smem, size = 0x200, scoped, tag = 'input window, operand 2, single buffered']
    #allocation9 [shape = 'u8[512]{0}', space=vmem, size = 0x400, scoped, tag = 'output window, operand 0, single buffered']
    %11 = vsyncpa [#allocation5], 0
    %12 = vsyncpa [#allocation7], 0
    %13 = vsyncpa [#allocation4], 0
    // Predicated region
    $region2: #{tpu_custom_call.1} parent=1 // pred_check
      _
    $region3: #{tpu_custom_call.1} parent=1 // pred_check_branch
      %15 = sbr.rel (0) target = $region5
    $region4: #{tpu_custom_call.1} parent=1 // pred_region
      %s17 = ssub.s32 16, 16
      %18 = vsyncadd [#allocation5], %s17
      %s20 = sshll.u32 %s0, 4
      %s21 = int_to_ptr.vmem [resolvable:$true] %s20
      %23 = dma.vmem_to_smem %s21, 16, [#allocation3], [#allocation5]
    $region5: #{tpu_custom_call.1} parent=1 // pred_fallthru
      _
    // Predicated region
    $region6: #{tpu_custom_call.1} parent=1 // pred_check
      _
    $region7: #{tpu_custom_call.1} parent=1 // pred_check_branch
      %25 = sbr.rel (0) target = $region9
    $region8: #{tpu_custom_call.1} parent=1 // pred_region
      %s27 = ssub.s32 16, 16
      %28 = vsyncadd [#allocation7], %s27
      %s30 = sshll.u32 %s1, 4
      %s31 = int_to_ptr.vmem [resolvable:$true] %s30
      %33 = dma.vmem_to_smem %s31, 16, [#allocation6], [#allocation7]
    $region9: #{tpu_custom_call.1} parent=1 // pred_fallthru
      _
    // Predicated region
    $region10: #{tpu_custom_call.1} parent=1 // pred_check
      _
    $region11: #{tpu_custom_call.1} parent=1 // pred_check_branch
      %35 = sbr.rel (0) target = $region13
    $region12: #{tpu_custom_call.1} parent=1 // pred_region
      %s37 = ssub.s32 16, 16
      %38 = vsyncadd [#allocation7], %s37
      %s40 = sshll.u32 %s2, 4
      %s41 = int_to_ptr.vmem [resolvable:$true] %s40
      %43 = dma.vmem_to_smem %s41, 16, [#allocation8], [#allocation7]
    $region13: #{tpu_custom_call.1} parent=1 // pred_fallthru
      _
    // Predicated region
    $region14: #{tpu_custom_call.1} parent=1 // pred_check
      _
    $region15: #{tpu_custom_call.1} parent=1 // pred_check_branch
      %45 = sbr.rel (0) target = $region17
    $region16: #{tpu_custom_call.1} parent=1 // pred_region
      _
    $region17: #{tpu_custom_call.1} parent=1 // pred_fallthru
      _
    // Predicated region
    $region18: #{tpu_custom_call.1} parent=1 // pred_check
      _
    $region19: #{tpu_custom_call.1} parent=1 // pred_check_branch
      %47 = sbr.rel (0) target = $region21
    $region20: #{tpu_custom_call.1} parent=1 // pred_region
      _
    $region21: #{tpu_custom_call.1} parent=1 // pred_fallthru
      _
    // Predicated region
    $region22: #{tpu_custom_call.1} parent=1 // pred_check
      _
    $region23: #{tpu_custom_call.1} parent=1 // pred_check_branch
      %49 = sbr.rel (0) target = $region25
    $region24: #{tpu_custom_call.1} parent=1 // pred_region
      %50 = dma.done [#allocation5], 16
    $region25: #{tpu_custom_call.1} parent=1 // pred_fallthru
      _
    // Predicated region
    $region26: #{tpu_custom_call.1} parent=1 // pred_check
      _
    $region27: #{tpu_custom_call.1} parent=1 // pred_check_branch
      %52 = sbr.rel (0) target = $region29
    $region28: #{tpu_custom_call.1} parent=1 // pred_region
      %53 = dma.done [#allocation7], 16
    $region29: #{tpu_custom_call.1} parent=1 // pred_fallthru
      _
    // Predicated region
    $region30: #{tpu_custom_call.1} parent=1 // pred_check
      _
    $region31: #{tpu_custom_call.1} parent=1 // pred_check_branch
      %55 = sbr.rel (0) target = $region33
    $region32: #{tpu_custom_call.1} parent=1 // pred_region
      %56 = dma.done [#allocation7], 16
    $region33: #{tpu_custom_call.1} parent=1 // pred_fallthru
      _
    %57 = sfence
    %v58 = vld [vmem:[%s4] sm:$0x1]
    %v59 = vld [vmem:[%s4 + $0x1] sm:$0x1]
    %s60 = sld [smem:[#allocation6]]
    %s61 = sld [smem:[#allocation3]]
    %v62 = vstv %s61
    %v63 = vmul.f32 %v58, %v62
    %v64 = vstv %s60
    %v65 = vadd.f32 %v64, %v63
    %s66 = sld [smem:[#allocation3 + $0x2]]
    %v67 = vstv %s66
    %v68 = vmul.f32 %v59, %v67
    %v69 = vadd.f32 %v65, %v68
    %v70 = vxor.u32 %v69, 2147483648
    %v71 = vmul.f32 %v70, 1.442695
    %v72 = vpow.pop %v71
    %v73 = vadd.f32 %v72, 1.0
    %v74 = vrcp.pop %v73
    %v75 = vmul.f32 1.0, %v74
    %s76 = sld [smem:[#allocation6 + $0x1]]
    %s77 = sld [smem:[#allocation3 + $0x1]]
    %v78 = vstv %s77
    %v79 = vmul.f32 %v58, %v78
    %v80 = vstv %s76
    %v81 = vadd.f32 %v80, %v79
    %s82 = sld [smem:[#allocation3 + $0x3]]
    %v83 = vstv %s82
    %v84 = vmul.f32 %v59, %v83
    %v85 = vadd.f32 %v81, %v84
    %v86 = vxor.u32 %v85, 2147483648
    %v87 = vmul.f32 %v86, 1.442695
    %v88 = vpow.pop %v87
    %v89 = vadd.f32 %v88, 1.0
    %v90 = vrcp.pop %v89
    %v91 = vmul.f32 1.0, %v90
    %s92 = sld [smem:[#allocation2]]
    %s93 = sld [smem:[#allocation8]]
    %v94 = vstv %s93
    %v95 = vmul.f32 %v75, %v94
    %v96 = vstv %s92
    %v97 = vadd.f32 %v96, %v95
    %s98 = sld [smem:[#allocation8 + $0x1]]
    %v99 = vstv %s98
    %v100 = vmul.f32 %v91, %v99
    %v101 = vadd.f32 %v97, %v100
    %v102 = vxor.u32 %v101, 2147483648
    %v103 = vmul.f32 %v102, 1.442695
    %v104 = vpow.pop %v103
    %v105 = vadd.f32 %v104, 1.0
    %v106 = vrcp.pop %v105
    %v107 = vmul.f32 1.0, %v106
    %108 = vst [vmem:[#allocation9] sm:$0x1] %v107
    // Predicated region
    $region34: #{tpu_custom_call.1} parent=1 // pred_check
      _
    $region35: #{tpu_custom_call.1} parent=1 // pred_check_branch
      %110 = sbr.rel (0) target = $region37
    $region36: #{tpu_custom_call.1} parent=1 // pred_region
      %s112 = ssub.s32 16, 16
      %113 = vsyncadd [#allocation4], %s112
      %s115 = sshll.u32 [#allocation9], 4
      %s116 = int_to_ptr.vmem [resolvable:$true] %s115
      %118 = dma.vmem_to_hbm [thread:$0]  %s116, 16, %s5, [#allocation4]
    $region37: #{tpu_custom_call.1} parent=1 // pred_fallthru
      _
    // Predicated region
    $region38: #{tpu_custom_call.1} parent=1 // pred_check
      _
    $region39: #{tpu_custom_call.1} parent=1 // pred_check_branch
      %120 = sbr.rel (0) target = $region41
    $region40: #{tpu_custom_call.1} parent=1 // pred_region
      %121 = dma.done [#allocation4], 16
    $region41: #{tpu_custom_call.1} parent=1 // pred_fallthru
      _
    %122 = vsyncpa [#allocation4], 1
    %123 = vsyncpa [#allocation5], 1
    %124 = vsyncpa [#allocation7], 1

</llo_original>
